<compile_context>
chip_gen: v7x
topology: tpu7x:2x2x1
jax: 0.10.0
libtpu: 0.0.40
codegen_flags: <defaults>
</compile_context>

<pallas_src>
import jax
import jax.numpy as jnp
from jax.experimental import pallas as pl
from jax.experimental.pallas import tpu as pltpu


def _mlp_kernel(x_ref, w1_ref, b1_ref, w2_ref, b2_ref, out_ref):
    # Layout: features on sublanes, batch on lanes.
    x = x_ref[...]            # (2, BN)  f32
    w1 = w1_ref[...]          # (2, 2)   (out, in)
    b1 = b1_ref[...]          # (2, 1)
    w2 = w2_ref[...]          # (4, 2)   (out, in)
    b2 = b2_ref[...]          # (4, 1)

    x0 = x[0:1, :]            # (1, BN)
    x1 = x[1:2, :]            # (1, BN)

    # lin1 (K=2 contraction unrolled onto the VPU, no MXU pass):
    #   a1[o, :] = w1[o,0]*x0 + w1[o,1]*x1 + b1[o]
    a1 = w1[:, 0:1] * x0 + w1[:, 1:2] * x1 + b1          # (2, BN)
    h1 = jax.nn.sigmoid(a1)

    h1_0 = h1[0:1, :]
    h1_1 = h1[1:2, :]

    # lin2: a2[o, :] = w2[o,0]*h1_0 + w2[o,1]*h1_1 + b2[o]
    a2 = w2[:, 0:1] * h1_0 + w2[:, 1:2] * h1_1 + b2      # (4, BN)

    # softmax written as exp / sum(exp), matching the torch code.
    e = jnp.exp(a2)                                      # (4, BN), EUP
    denom = jnp.sum(e, axis=0, keepdims=True)            # (1, BN) tiny sublane reduce
    inv = pl.reciprocal(denom, approx=True)              # EUP, frees the VALU slot
    out_ref[...] = e * inv                               # lane-dense store


def first_network_linear_optim(x, w1, b1, w2, b2, *, block_n=1024):
    """x: (N, 2) f32; w1: (2,2); b1: (2,); w2: (4,2); b2: (4,).  Returns (N, 4)."""
    assert block_n % 128 == 0, "block_n must be a multiple of 128 (lane width)"
    n = x.shape[0]
    n_pad = ((n + block_n - 1) // block_n) * block_n

    # Lane-dense layout: batch on the last (lane) axis.
    xt = x.astype(jnp.float32).T                          # (2, N)
    if n_pad != n:
        xt = jnp.pad(xt, ((0, 0), (0, n_pad - n)))        # (2, n_pad)

    b1_2d = b1.reshape(2, 1).astype(jnp.float32)
    b2_2d = b2.reshape(4, 1).astype(jnp.float32)
    w1 = w1.astype(jnp.float32)
    w2 = w2.astype(jnp.float32)

    grid = (n_pad // block_n,)
    grid_spec = pltpu.PrefetchScalarGridSpec(
        num_scalar_prefetch=0,
        grid=grid,
        in_specs=[
            pl.BlockSpec((2, block_n), lambda i: (0, i)),   # X, tiled over batch
            pl.BlockSpec((2, 2), lambda i: (0, 0)),         # W1, resident
            pl.BlockSpec((2, 1), lambda i: (0, 0)),         # b1, resident
            pl.BlockSpec((4, 2), lambda i: (0, 0)),         # W2, resident
            pl.BlockSpec((4, 1), lambda i: (0, 0)),         # b2, resident
        ],
        out_specs=pl.BlockSpec((4, block_n), lambda i: (0, i)),
    )

    out_t = pl.pallas_call(
        _mlp_kernel,
        out_shape=jax.ShapeDtypeStruct((4, n_pad), jnp.float32),
        grid_spec=grid_spec,
        compiler_params=pltpu.CompilerParams(
            dimension_semantics=("parallel",),               # megacore on v7x
        ),
    )(xt, w1, b1_2d, w2, b2_2d)

    # Transpose back to the module's (N, 4) convention outside the kernel.
    return out_t[:, :n].T


def init_params(key):
    """Deterministic init mimicking torch.nn.Linear default (uniform +-1/sqrt(fan_in))."""
    k1, k2, k3, k4 = jax.random.split(key, 4)
    bound = 1.0 / jnp.sqrt(2.0)  # fan_in = 2 for both layers
    w1 = jax.random.uniform(k1, (2, 2), jnp.float32, -bound, bound)   # (out, in)
    b1 = jax.random.uniform(k2, (2,), jnp.float32, -bound, bound)
    w2 = jax.random.uniform(k3, (4, 2), jnp.float32, -bound, bound)   # (out, in)
    b2 = jax.random.uniform(k4, (4,), jnp.float32, -bound, bound)
    return w1, b1, w2, b2


if __name__ == "__main__":
    key = jax.random.PRNGKey(0)
    pkey, xkey = jax.random.split(key)
    w1, b1, w2, b2 = init_params(pkey)

    # Small batch; block_n=256 exercises both padding and a multi-step grid.
    n = 300
    x = jax.random.normal(xkey, (n, 2), jnp.float32)

    out = first_network_linear_optim(x, w1, b1, w2, b2, block_n=256)
    out = jax.block_until_ready(out)

    # Reference in plain JAX (exact divide, no approx reciprocal).
    a1 = x @ w1.T + b1
    h1 = jax.nn.sigmoid(a1)
    a2 = h1 @ w2.T + b2
    e = jnp.exp(a2)
    ref = e / jnp.sum(e, axis=-1, keepdims=True)

    assert out.shape == (n, 4)
    # Tolerance accounts for pl.reciprocal(approx=True) on the softmax denominator.
    assert jnp.allclose(out, ref, atol=2e-3, rtol=2e-3)

    print("KERNEL_OK")
</pallas_src>

<mosaic_0001>
module attributes {stable_mosaic.version = 11 : i64} {
  func.func @_mlp_kernel(%arg0: i32, %arg1: memref<2x256xf32, #tpu.memory_space<vmem>>, %arg2: memref<2x2xf32, #tpu.memory_space<vmem>>, %arg3: memref<2x1xf32, #tpu.memory_space<vmem>>, %arg4: memref<4x2xf32, #tpu.memory_space<vmem>>, %arg5: memref<4x1xf32, #tpu.memory_space<vmem>>, %arg6: memref<4x256xf32, #tpu.memory_space<vmem>>) attributes {dimension_semantics = [#tpu.dimension_semantics<parallel>], iteration_bounds = array<i64: 2>, scalar_prefetch = 0 : i64, scratch_operands = 0 : i64, tpu.core_type = #tpu.core_type<tc>, window_params = [{transform_indices = @transform_0, window_bounds = array<i64: 2, 256>}, {pipeline_mode = #tpu.pipeline_mode<synchronous>, transform_indices = @transform_1, window_bounds = array<i64: 2, 2>}, {pipeline_mode = #tpu.pipeline_mode<synchronous>, transform_indices = @transform_2, window_bounds = array<i64: 2, 1>}, {pipeline_mode = #tpu.pipeline_mode<synchronous>, transform_indices = @transform_3, window_bounds = array<i64: 4, 2>}, {pipeline_mode = #tpu.pipeline_mode<synchronous>, transform_indices = @transform_4, window_bounds = array<i64: 4, 1>}, {transform_indices = @transform_5, window_bounds = array<i64: 4, 256>}]} {
    %c0 = arith.constant 0 : index
    %c0_0 = arith.constant 0 : index
    %0 = vector.load %arg1[%c0, %c0_0] : memref<2x256xf32, #tpu.memory_space<vmem>>, vector<2x256xf32>
    %c0_1 = arith.constant 0 : index
    %c0_2 = arith.constant 0 : index
    %1 = vector.load %arg2[%c0_1, %c0_2] : memref<2x2xf32, #tpu.memory_space<vmem>>, vector<2x2xf32>
    %c0_3 = arith.constant 0 : index
    %c0_4 = arith.constant 0 : index
    %2 = vector.load %arg3[%c0_3, %c0_4] : memref<2x1xf32, #tpu.memory_space<vmem>>, vector<2x1xf32>
    %c0_5 = arith.constant 0 : index
    %c0_6 = arith.constant 0 : index
    %3 = vector.load %arg4[%c0_5, %c0_6] : memref<4x2xf32, #tpu.memory_space<vmem>>, vector<4x2xf32>
    %c0_7 = arith.constant 0 : index
    %c0_8 = arith.constant 0 : index
    %4 = vector.load %arg5[%c0_7, %c0_8] : memref<4x1xf32, #tpu.memory_space<vmem>>, vector<4x1xf32>
    %5 = vector.extract_strided_slice %0 {offsets = [0, 0], sizes = [1, 256], strides = [1, 1]} : vector<2x256xf32> to vector<1x256xf32>
    %6 = vector.extract_strided_slice %0 {offsets = [1, 0], sizes = [1, 256], strides = [1, 1]} : vector<2x256xf32> to vector<1x256xf32>
    %7 = vector.extract_strided_slice %1 {offsets = [0, 0], sizes = [2, 1], strides = [1, 1]} : vector<2x2xf32> to vector<2x1xf32>
    %8 = vector.broadcast %7 : vector<2x1xf32> to vector<2x256xf32>
    %9 = vector.broadcast %5 : vector<1x256xf32> to vector<2x256xf32>
    %10 = arith.mulf %8, %9 : vector<2x256xf32>
    %11 = vector.extract_strided_slice %1 {offsets = [0, 1], sizes = [2, 1], strides = [1, 1]} : vector<2x2xf32> to vector<2x1xf32>
    %12 = vector.broadcast %11 : vector<2x1xf32> to vector<2x256xf32>
    %13 = vector.broadcast %6 : vector<1x256xf32> to vector<2x256xf32>
    %14 = arith.mulf %12, %13 : vector<2x256xf32>
    %15 = arith.addf %10, %14 : vector<2x256xf32>
    %16 = vector.broadcast %2 : vector<2x1xf32> to vector<2x256xf32>
    %17 = arith.addf %15, %16 : vector<2x256xf32>
    %18 = arith.negf %17 : vector<2x256xf32>
    %19 = math.exp %18 : vector<2x256xf32>
    %cst = arith.constant 1.000000e+00 : f32
    %20 = vector.broadcast %cst : f32 to vector<2x256xf32>
    %21 = arith.addf %20, %19 : vector<2x256xf32>
    %22 = arith.divf %20, %21 : vector<2x256xf32>
    %23 = vector.extract_strided_slice %22 {offsets = [0, 0], sizes = [1, 256], strides = [1, 1]} : vector<2x256xf32> to vector<1x256xf32>
    %24 = vector.extract_strided_slice %22 {offsets = [1, 0], sizes = [1, 256], strides = [1, 1]} : vector<2x256xf32> to vector<1x256xf32>
    %25 = vector.extract_strided_slice %3 {offsets = [0, 0], sizes = [4, 1], strides = [1, 1]} : vector<4x2xf32> to vector<4x1xf32>
    %26 = vector.broadcast %25 : vector<4x1xf32> to vector<4x256xf32>
    %27 = vector.broadcast %23 : vector<1x256xf32> to vector<4x256xf32>
    %28 = arith.mulf %26, %27 : vector<4x256xf32>
    %29 = vector.extract_strided_slice %3 {offsets = [0, 1], sizes = [4, 1], strides = [1, 1]} : vector<4x2xf32> to vector<4x1xf32>
    %30 = vector.broadcast %29 : vector<4x1xf32> to vector<4x256xf32>
    %31 = vector.broadcast %24 : vector<1x256xf32> to vector<4x256xf32>
    %32 = arith.mulf %30, %31 : vector<4x256xf32>
    %33 = arith.addf %28, %32 : vector<4x256xf32>
    %34 = vector.broadcast %4 : vector<4x1xf32> to vector<4x256xf32>
    %35 = arith.addf %33, %34 : vector<4x256xf32>
    %36 = math.exp %35 : vector<4x256xf32>
    %cst_9 = arith.constant dense<0.000000e+00> : vector<256xf32>
    %37 = vector.multi_reduction <add>, %36, %cst_9 [0] : vector<4x256xf32> to vector<256xf32>
    %38 = vector.shape_cast %37 : vector<256xf32> to vector<1x256xf32>
    %39 = tpu.reciprocal %38 {approx = true} : vector<1x256xf32> -> vector<1x256xf32>
    %40 = vector.broadcast %39 : vector<1x256xf32> to vector<4x256xf32>
    %41 = arith.mulf %36, %40 : vector<4x256xf32>
    %c0_10 = arith.constant 0 : index
    %c0_11 = arith.constant 0 : index
    %42 = vector.load %arg6[%c0_10, %c0_11] : memref<4x256xf32, #tpu.memory_space<vmem>>, vector<4x256xf32>
    tpu.vector_store %arg6[%c0_10, %c0_11], %41 {strides = array<i32>} : memref<4x256xf32, #tpu.memory_space<vmem>>, vector<4x256xf32>,
    return
  }
  func.func @transform_0(%arg0: i32) -> (i32, i32) {
    %c0_i32 = arith.constant 0 : i32
    %c0_i32_0 = arith.constant 0 : i32
    return %c0_i32, %arg0 : i32, i32
  }
  func.func @transform_1(%arg0: i32) -> (i32, i32) {
    %c0_i32 = arith.constant 0 : i32
    %c0_i32_0 = arith.constant 0 : i32
    %c0_i32_1 = arith.constant 0 : i32
    return %c0_i32, %c0_i32_0 : i32, i32
  }
  func.func @transform_2(%arg0: i32) -> (i32, i32) {
    %c0_i32 = arith.constant 0 : i32
    %c0_i32_0 = arith.constant 0 : i32
    %c0_i32_1 = arith.constant 0 : i32
    return %c0_i32, %c0_i32_0 : i32, i32
  }
  func.func @transform_3(%arg0: i32) -> (i32, i32) {
    %c0_i32 = arith.constant 0 : i32
    %c0_i32_0 = arith.constant 0 : i32
    %c0_i32_1 = arith.constant 0 : i32
    return %c0_i32, %c0_i32_0 : i32, i32
  }
  func.func @transform_4(%arg0: i32) -> (i32, i32) {
    %c0_i32 = arith.constant 0 : i32
    %c0_i32_0 = arith.constant 0 : i32
    %c0_i32_1 = arith.constant 0 : i32
    return %c0_i32, %c0_i32_0 : i32, i32
  }
  func.func @transform_5(%arg0: i32) -> (i32, i32) {
    %c0_i32 = arith.constant 0 : i32
    %c0_i32_0 = arith.constant 0 : i32
    return %c0_i32, %arg0 : i32, i32
  }
}

</mosaic_0001>

<llo_original>
// kernel: tpu_custom_call.1
$region0: #{tpu_custom_call.1}
  #allocation0 [shape = 'u32[]', space=smem, size = 0x4, offset = 0x4, fixed_abs, tag = 'smem constant byte address 0x4 - core index']
  #allocation1 [shape = 'u32[144,128]{1,0:T(1,128)}', space=vmem, size = 0x12000, scoped, tag = 'internal scratch']
  %s0 = inlined_call_operand.vmem [shape: f32[2,512], index: 0, kind: input, shape index: {}]
  %s1 = inlined_call_operand.vmem [shape: f32[2,2], index: 1, kind: input, shape index: {}]
  %s2 = inlined_call_operand.vmem [shape: f32[2,1], index: 2, kind: input, shape index: {}]
  %s3 = inlined_call_operand.vmem [shape: f32[4,2], index: 3, kind: input, shape index: {}]
  %s4 = inlined_call_operand.vmem [shape: f32[4,1], index: 4, kind: input, shape index: {}]
  %s5 = inlined_call_operand.hbm [shape: f32[4,512], index: 5, kind: output, shape index: {}]
  %s6 = sld [smem:[#allocation0]]
  $region53: #{tpu_custom_call.1} parent=0
    _
  %s8 = ssub.s32 1, %s6
  %s9 = scalar_select 0, %s8, %s6
  $region1: #{tpu_custom_call.1} parent=0
    #allocation2 [shape = 'u8[8192]{0}', space=vmem, size = 0x2000, scoped, tag = 'output window, operand 0']
    #allocation3 [shape = 's32[2]{0}', space=sflag, size = 0x8, scoped, tag = 'scoped memory for tpu_custom_call.1']
    %10 = vsyncpa [#allocation3], 0
    %s11 = scalar_lea.sflag [#allocation3], 1
    %12 = vsyncpa %s11, 0
    loop: start=0, step=1, limit=4
    $region2: #{tpu_custom_call.1} parent=1 // loop_pre_header
      _
    $region3: #{tpu_custom_call.1} parent=1 // loop_header
      %s14 = sphi 0, %s18
      %p15 = scmp.ge.s32.totalorder %s14, 4
      %s24 = sphi 0, %s26
      %s27 = sphi 0, %s24
      %s28 = sphi 0, %s27
      %s44 = sphi 0, %s28
      %s48 = sphi 0, %s48
      %s50 = sphi 0, %s48
      %s51 = sphi 0, %s50
      %s65 = sphi 0, %s51
      %s69 = sphi 0, %s69
      %s71 = sphi 0, %s69
      %s72 = sphi 0, %s71
      %s86 = sphi 0, %s72
      %s90 = sphi 0, %s90
      %s92 = sphi 0, %s90
      %s93 = sphi 0, %s92
      %s107 = sphi 0, %s93
      %s111 = sphi 0, %s111
      %s113 = sphi 0, %s111
      %s114 = sphi 0, %s113
      %s128 = sphi 0, %s114
      %s134 = sphi 0, %s136
      %s137 = sphi 0, %s134
      %s138 = sphi 0, %s137
      %s154 = sphi 0, %s138
    $region4: #{tpu_custom_call.1} parent=1 // loop_header_branch
      %17 = sbr.rel (%p15) target = $region8
    $region5: #{tpu_custom_call.1} parent=1 // loop_body
      %s19 = ssub.s32 %s14, 1
      %s20 = ssub.s32 %s14, 2
      %s21 = sadd.s32 %s14, 1
      %s22 = ssub.s32 %s14, %s21
      %p23 = scmp.eq.s32.totalorder %s22, 0
      %s25 = sadd.s32 %s24, 1
      %s26 = scalar_select %p23, %s24, %s25
      %p29 = pneg %p23
      %p30 = scmp.eq.s32.totalorder %s14, 1
      %p31 = por %p29, %p30
      %p32 = scmp.ne.s32.totalorder %s24, %s27
      %p33 = scmp.eq.s32.totalorder %s14, 0
      %p34 = por %p32, %p33
      %p35 = scmp.ne.s32.totalorder %s24, %s27
      %p36 = scmp.eq.s32.totalorder %s19, 1
      %p37 = por %p35, %p36
      %p38 = scmp.ne.s32.totalorder %s27, %s28
      %p39 = scmp.eq.s32.totalorder %s19, 0
      %p40 = por %p38, %p39
      %p41 = scmp.ne.s32.totalorder %s27, %s28
      %p42 = scmp.eq.s32.totalorder %s20, 1
      %p43 = por %p41, %p42
      %p45 = scmp.ne.s32.totalorder %s28, %s44
      %p46 = scmp.eq.s32.totalorder %s20, 0
      %p47 = por %p45, %p46
      %s49 = sadd.s32 %s48, 1
      %p52 = scmp.eq.s32.totalorder %s14, 1
      %p53 = scmp.ne.s32.totalorder %s48, %s50
      %p54 = scmp.eq.s32.totalorder %s14, 0
      %p55 = por %p53, %p54
      %p56 = scmp.ne.s32.totalorder %s48, %s50
      %p57 = scmp.eq.s32.totalorder %s19, 1
      %p58 = por %p56, %p57
      %p59 = scmp.ne.s32.totalorder %s50, %s51
      %p60 = scmp.eq.s32.totalorder %s19, 0
      %p61 = por %p59, %p60
      %p62 = scmp.ne.s32.totalorder %s50, %s51
      %p63 = scmp.eq.s32.totalorder %s20, 1
      %p64 = por %p62, %p63
      %p66 = scmp.ne.s32.totalorder %s51, %s65
      %p67 = scmp.eq.s32.totalorder %s20, 0
      %p68 = por %p66, %p67
      %s70 = sadd.s32 %s69, 1
      %p73 = scmp.eq.s32.totalorder %s14, 1
      %p74 = scmp.ne.s32.totalorder %s69, %s71
      %p75 = scmp.eq.s32.totalorder %s14, 0
      %p76 = por %p74, %p75
      %p77 = scmp.ne.s32.totalorder %s69, %s71
      %p78 = scmp.eq.s32.totalorder %s19, 1
      %p79 = por %p77, %p78
      %p80 = scmp.ne.s32.totalorder %s71, %s72
      %p81 = scmp.eq.s32.totalorder %s19, 0
      %p82 = por %p80, %p81
      %p83 = scmp.ne.s32.totalorder %s71, %s72
      %p84 = scmp.eq.s32.totalorder %s20, 1
      %p85 = por %p83, %p84
      %p87 = scmp.ne.s32.totalorder %s72, %s86
      %p88 = scmp.eq.s32.totalorder %s20, 0
      %p89 = por %p87, %p88
      %s91 = sadd.s32 %s90, 1
      %p94 = scmp.eq.s32.totalorder %s14, 1
      %p95 = scmp.ne.s32.totalorder %s90, %s92
      %p96 = scmp.eq.s32.totalorder %s14, 0
      %p97 = por %p95, %p96
      %p98 = scmp.ne.s32.totalorder %s90, %s92
      %p99 = scmp.eq.s32.totalorder %s19, 1
      %p100 = por %p98, %p99
      %p101 = scmp.ne.s32.totalorder %s92, %s93
      %p102 = scmp.eq.s32.totalorder %s19, 0
      %p103 = por %p101, %p102
      %p104 = scmp.ne.s32.totalorder %s92, %s93
      %p105 = scmp.eq.s32.totalorder %s20, 1
      %p106 = por %p104, %p105
      %p108 = scmp.ne.s32.totalorder %s93, %s107
      %p109 = scmp.eq.s32.totalorder %s20, 0
      %p110 = por %p108, %p109
      %s112 = sadd.s32 %s111, 1
      %p115 = scmp.eq.s32.totalorder %s14, 1
      %p116 = scmp.ne.s32.totalorder %s111, %s113
      %p117 = scmp.eq.s32.totalorder %s14, 0
      %p118 = por %p116, %p117
      %p119 = scmp.ne.s32.totalorder %s111, %s113
      %p120 = scmp.eq.s32.totalorder %s19, 1
      %p121 = por %p119, %p120
      %p122 = scmp.ne.s32.totalorder %s113, %s114
      %p123 = scmp.eq.s32.totalorder %s19, 0
      %p124 = por %p122, %p123
      %p125 = scmp.ne.s32.totalorder %s113, %s114
      %p126 = scmp.eq.s32.totalorder %s20, 1
      %p127 = por %p125, %p126
      %p129 = scmp.ne.s32.totalorder %s114, %s128
      %p130 = scmp.eq.s32.totalorder %s20, 0
      %p131 = por %p129, %p130
      %s132 = ssub.s32 %s14, %s21
      %p133 = scmp.eq.s32.totalorder %s132, 0
      %s135 = sadd.s32 %s134, 1
      %s136 = scalar_select %p133, %s134, %s135
      %p139 = pneg %p133
      %p140 = scmp.eq.s32.totalorder %s14, 1
      %p141 = por %p139, %p140
      %p142 = scmp.ne.s32.totalorder %s134, %s137
      %p143 = scmp.eq.s32.totalorder %s14, 0
      %p144 = por %p142, %p143
      %p145 = scmp.ne.s32.totalorder %s134, %s137
      %p146 = scmp.eq.s32.totalorder %s19, 1
      %p147 = por %p145, %p146
      %p148 = scmp.ne.s32.totalorder %s137, %s138
      %p149 = scmp.eq.s32.totalorder %s19, 0
      %p150 = por %p148, %p149
      %p151 = scmp.ne.s32.totalorder %s137, %s138
      %p152 = scmp.eq.s32.totalorder %s20, 1
      %p153 = por %p151, %p152
      %p155 = scmp.ne.s32.totalorder %s138, %s154
      %p156 = scmp.eq.s32.totalorder %s20, 0
      %p157 = por %p155, %p156
      %p158 = scmp.le.s32.totalorder 1, %s14
      %p159 = scmp.lt.s32.totalorder %s14, 3
      %p160 = pnand %p158, %p159
      %p161 = pneg %p160
      // Predicated region
      $region9: #{tpu_custom_call.1} parent=5 // pred_check
        _
      $region10: #{tpu_custom_call.1} parent=5 // pred_check_branch
        %163 = sbr.rel (%p160) target = $region12
      $region11: #{tpu_custom_call.1} parent=5 // pred_region
        %s164 = ssub.s32 %s14, 1
        // Predicated region
        $region13: #{tpu_custom_call.1} parent=11 // pred_check
          %p165 = pneg %p61
        $region14: #{tpu_custom_call.1} parent=11 // pred_check_branch
          %167 = sbr.rel (%p165) target = $region16
        $region15: #{tpu_custom_call.1} parent=11 // pred_region
          _
        $region16: #{tpu_custom_call.1} parent=11 // pred_fallthru
          _
        // Predicated region
        $region17: #{tpu_custom_call.1} parent=11 // pred_check
          %p168 = pneg %p82
        $region18: #{tpu_custom_call.1} parent=11 // pred_check_branch
          %170 = sbr.rel (%p168) target = $region20
        $region19: #{tpu_custom_call.1} parent=11 // pred_region
          _
        $region20: #{tpu_custom_call.1} parent=11 // pred_fallthru
          _
        // Predicated region
        $region21: #{tpu_custom_call.1} parent=11 // pred_check
          %p171 = pneg %p103
        $region22: #{tpu_custom_call.1} parent=11 // pred_check_branch
          %173 = sbr.rel (%p171) target = $region24
        $region23: #{tpu_custom_call.1} parent=11 // pred_region
          _
        $region24: #{tpu_custom_call.1} parent=11 // pred_fallthru
          _
        // Predicated region
        $region25: #{tpu_custom_call.1} parent=11 // pred_check
          %p174 = pneg %p124
        $region26: #{tpu_custom_call.1} parent=11 // pred_check_branch
          %176 = sbr.rel (%p174) target = $region28
        $region27: #{tpu_custom_call.1} parent=11 // pred_region
          _
        $region28: #{tpu_custom_call.1} parent=11 // pred_fallthru
          _
      $region12: #{tpu_custom_call.1} parent=5 // pred_fallthru
        _
      %p177 = scmp.lt.s32.totalorder %s14, 2
      // Predicated region
      $region29: #{tpu_custom_call.1} parent=5 // pred_check
        %p178 = pneg %p177
      $region30: #{tpu_custom_call.1} parent=5 // pred_check_branch
        %180 = sbr.rel (%p178) target = $region32
      $region31: #{tpu_custom_call.1} parent=5 // pred_region
        // Predicated region
        $region33: #{tpu_custom_call.1} parent=31 // pred_check
          %p181 = pneg %p34
        $region34: #{tpu_custom_call.1} parent=31 // pred_check_branch
          %183 = sbr.rel (%p181) target = $region36
        $region35: #{tpu_custom_call.1} parent=31 // pred_region
          %s184 = smul.u32 2, %s14
          %p185 = scmp.lt.s32.totalorder %s184, 3
          %s186 = scalar_select %p185, %s184, 3
          %s187 = smul.addr %s186, 2
          %s188 = scalar_lea.vmem %s0, %s187
          %s189 = smul.u32 2, %s14
        $region36: #{tpu_custom_call.1} parent=31 // pred_fallthru
          _
      $region32: #{tpu_custom_call.1} parent=5 // pred_fallthru
        _
      %p190 = scmp.le.s32.totalorder 1, %s14
      %p191 = scmp.lt.s32.totalorder %s14, 3
      %p192 = pnand %p190, %p191
      %p193 = pneg %p192
      // Predicated region
      $region37: #{tpu_custom_call.1} parent=5 // pred_check
        _
      $region38: #{tpu_custom_call.1} parent=5 // pred_check_branch
        %195 = sbr.rel (%p192) target = $region40
      $region39: #{tpu_custom_call.1} parent=5 // pred_region
        %s196 = ssub.s32 %s14, 1
        %s197 = smul.u32 2, %s19
        %p198 = scmp.lt.s32.totalorder %s197, 3
        %s199 = scalar_select %p198, %s197, 3
        %s200 = smul.addr %s199, 2
        %s201 = scalar_lea.vmem %s0, %s200
        %p202 = pneg %p40
        %p203 = pneg %p37
        %p204 = pneg %p61
        %p205 = pneg %p58
        %p206 = pneg %p82
        %p207 = pneg %p79
        %p208 = pneg %p103
        %p209 = pneg %p100
        %p210 = pneg %p124
        %p211 = pneg %p121
        %p212 = pneg %p150
        %p213 = pneg %p147
        %s214 = sand.u32 %s137, 1
        %s215 = scalar_lea.sflag [#allocation3], %s214
        %s216 = sand.u32 %s137, 1
        %s217 = smul.addr %s216, 8
        %s218 = scalar_lea.vmem [#allocation2], %s217
        %s219 = smul.u32 2, %s19
        %p220 = scmp.lt.s32.totalorder %s219, 3
        %s221 = scalar_select %p220, %s219, 3
        %s222 = smul.addr %s221, 2
        %s223 = scalar_lea.vmem %s0, %s222
        %s224 = smul.u32 2, %s19
        %s225 = smul.u32 2, %s19
        %v226 = vld [vmem:[%s223] sm:$0xf]
        %v227 = vld [vmem:[%s1] sm:$0x3]
        %v228 = vld [vmem:[%s2] sm:$0x3]
        %v229 = vld [vmem:[%s3] sm:$0xf]
        %v230 = vld [vmem:[%s4] sm:$0xf]
        %232 = vset.pattern.permute.xlu0 0
        %233 = vperm.xlu0 %232, %v227
        %v234 = vpop.permute.xlu0 %233
        %v237 = vlaneseq
        %v238 = vshrl.u32 %v237, 7
        %v239 = vsub.s32 0, %v238
        %v240 = vrot.slane %v226, %v239
        %v241 = vlaneseq
        %v242 = vshrl.u32 %v241, 7
        %v243 = vsub.s32 2, %v242
        %v244 = vrot.slane %v226, %v243
        %v247 = vlaneseq
        %v248 = vshrl.u32 %v247, 7
        %v249 = vsub.s32 0, %v248
        %v250 = vrot.slane %v240, %v249
        %v251 = vlaneseq
        %v252 = vshrl.u32 %v251, 7
        %v253 = vsub.s32 0, %v252
        %v254 = vrot.slane %v244, %v253
        %v255 = vmul.f32 %v234, %v250
        %v256 = vmul.f32 %v234, %v254
        %257 = vset.pattern.permute.xlu0 1
        %258 = vperm.xlu0 %257, %v227
        %v259 = vpop.permute.xlu0 %258
        %v261 = vlaneseq
        %v262 = vshrl.u32 %v261, 7
        %v263 = vsub.s32 1, %v262
        %v264 = vrot.slane %v226, %v263
        %v265 = vlaneseq
        %v266 = vshrl.u32 %v265, 7
        %v267 = vsub.s32 3, %v266
        %v268 = vrot.slane %v226, %v267
        %v271 = vlaneseq
        %v272 = vshrl.u32 %v271, 7
        %v273 = vsub.s32 1, %v272
        %v274 = vrot.slane %v264, %v273
        %v275 = vlaneseq
        %v276 = vshrl.u32 %v275, 7
        %v277 = vsub.s32 1, %v276
        %v278 = vrot.slane %v268, %v277
        %v279 = vmul.f32 %v259, %v274
        %v280 = vmul.f32 %v259, %v278
        %v281 = vadd.f32 %v255, %v279
        %v282 = vadd.f32 %v256, %v280
        %284 = vset.pattern.permute.xlu0 0
        %285 = vperm.xlu0 %284, %v228
        %v286 = vpop.permute.xlu0 %285
        %v288 = vadd.f32 %v281, %v286
        %v289 = vadd.f32 %v282, %v286
        %v290 = vxor.u32 %v288, 2147483648
        %v291 = vxor.u32 %v289, 2147483648
        %v292 = vmul.f32 %v290, 1.442695
        %v293 = vpow.pop %v292
        %v294 = vmul.f32 %v291, 1.442695
        %v295 = vpow.pop %v294
        %v296 = vadd.f32 %v293, 1.0
        %v297 = vadd.f32 %v295, 1.0
        %v298 = vrcp.pop %v296
        %v299 = vmul.f32 1.0, %v298
        %v300 = vrcp.pop %v297
        %v301 = vmul.f32 1.0, %v300
        %303 = vset.pattern.permute.xlu0 0
        %304 = vperm.xlu0 %303, %v229
        %v305 = vpop.permute.xlu0 %304
        %v307 = vlaneseq
        %v308 = vshrl.u32 %v307, 7
        %v309 = vsub.s32 0, %v308
        %v310 = vrot.slane %v299, %v309
        %v311 = vlaneseq
        %v312 = vshrl.u32 %v311, 7
        %v313 = vsub.s32 0, %v312
        %v314 = vrot.slane %v301, %v313
        %v315 = vmul.f32 %v305, %v310
        %v316 = vmul.f32 %v305, %v314
        %317 = vset.pattern.permute.xlu0 1
        %318 = vperm.xlu0 %317, %v229
        %v319 = vpop.permute.xlu0 %318
        %v321 = vlaneseq
        %v322 = vshrl.u32 %v321, 7
        %v323 = vsub.s32 1, %v322
        %v324 = vrot.slane %v299, %v323
        %v325 = vlaneseq
        %v326 = vshrl.u32 %v325, 7
        %v327 = vsub.s32 1, %v326
        %v328 = vrot.slane %v301, %v327
        %v329 = vmul.f32 %v319, %v324
        %v330 = vmul.f32 %v319, %v328
        %v331 = vadd.f32 %v315, %v329
        %v332 = vadd.f32 %v316, %v330
        %334 = vset.pattern.permute.xlu0 0
        %335 = vperm.xlu0 %334, %v230
        %v336 = vpop.permute.xlu0 %335
        %v338 = vadd.f32 %v331, %v336
        %v339 = vadd.f32 %v332, %v336
        %v340 = vmul.f32 %v338, 1.442695
        %v341 = vpow.pop %v340
        %v342 = vmul.f32 %v339, 1.442695
        %v343 = vpow.pop %v342
        %vm344 = vcmask 1043456
        %v345 = vsel %vm344, %v341, 0.0
        %v346 = vrot.slane %v345, 4
        %v347 = vadd.f32 %v345, %v346
        %v348 = vrot.slane %v347, 2
        %v349 = vadd.f32 %v347, %v348
        %v350 = vrot.slane %v349, 1
        %v351 = vadd.f32 %v349, %v350
        %v352 = vsel %vm344, %v343, 0.0
        %v353 = vrot.slane %v352, 4
        %v354 = vadd.f32 %v352, %v353
        %v355 = vrot.slane %v354, 2
        %v356 = vadd.f32 %v354, %v355
        %v357 = vrot.slane %v356, 1
        %v358 = vadd.f32 %v356, %v357
        %v359 = vrcp.pop %v351
        %v360 = vrcp.pop %v358
        %v361 = vmul.f32 %v341, %v359
        %v362 = vmul.f32 %v343, %v360
        %v365 = vcombine.low %v361, %v362
        %367 = vst [vmem:[%s218] sm:$0xff] %v365
        %s368 = sand.u32 %s137, 1
        %s369 = scalar_lea.sflag [#allocation3], %s368
        %s370 = sand.u32 %s137, 1
        %s371 = smul.addr %s370, 8
        %s372 = scalar_lea.vmem [#allocation2], %s371
        // Predicated region
        $region41: #{tpu_custom_call.1} parent=39 // pred_check
          %p373 = pneg %p147
        $region42: #{tpu_custom_call.1} parent=39 // pred_check_branch
          %375 = sbr.rel (%p373) target = $region44
        $region43: #{tpu_custom_call.1} parent=39 // pred_region
          %s376 = smul.u32 2, %s19
          %s378 = ssub.s32 128, 128
          %379 = vsyncadd %s369, %s378
          %s380 = smul.addr %s376, 64
          %s381 = scalar_lea.hbm %s5, %s380
          %s383 = sshll.u32 %s372, 4
          %s384 = int_to_ptr.vmem [resolvable:$true] %s383
          %386 = dma.vmem_to_hbm [thread:$0]  %s384, 128, %s381, %s369
        $region44: #{tpu_custom_call.1} parent=39 // pred_fallthru
          _
      $region40: #{tpu_custom_call.1} parent=5 // pred_fallthru
        _
      %p387 = scmp.le.s32.totalorder 2, %s14
      // Predicated region
      $region45: #{tpu_custom_call.1} parent=5 // pred_check
        %p388 = pneg %p387
      $region46: #{tpu_custom_call.1} parent=5 // pred_check_branch
        %390 = sbr.rel (%p388) target = $region48
      $region47: #{tpu_custom_call.1} parent=5 // pred_region
        %s391 = ssub.s32 %s14, 2
        // Predicated region
        $region49: #{tpu_custom_call.1} parent=47 // pred_check
          %p392 = pneg %p153
        $region50: #{tpu_custom_call.1} parent=47 // pred_check_branch
          %394 = sbr.rel (%p392) target = $region52
        $region51: #{tpu_custom_call.1} parent=47 // pred_region
          %s395 = sand.u32 %s138, 1
          %s396 = scalar_lea.sflag [#allocation3], %s395
          %s397 = sand.u32 %s138, 1
          %s398 = smul.addr %s397, 8
          %s399 = scalar_lea.vmem [#allocation2], %s398
          %400 = dma.done %s396, 128
        $region52: #{tpu_custom_call.1} parent=47 // pred_fallthru
          _
      $region48: #{tpu_custom_call.1} parent=5 // pred_fallthru
        _
    $region6: #{tpu_custom_call.1} parent=1 // loop_footer
      %s18 = sadd.s32 1, %s14
    $region7: #{tpu_custom_call.1} parent=1 // loop_footer_branch
      %13 = sbr.rel target = $region3
    $region8: #{tpu_custom_call.1} parent=1 // loop_exit
      _
    %401 = vsyncpa [#allocation3], 1
    %s402 = scalar_lea.sflag [#allocation3], 1
    %403 = vsyncpa %s402, 1

</llo_original>
